<compile_context>
chip_gen: v5e
topology: v5e:2x2
jax: 0.10.0
libtpu: 0.0.40
codegen_flags: <defaults>
</compile_context>

<pallas_src>
import math

import jax
import jax.numpy as jnp
from jax.experimental import pallas as pl
from jax.experimental.pallas import tpu as pltpu


def _round_up(x, m):
    return ((x + m - 1) // m) * m


def _make_gcn_kernel(b_blk, b_per_tile, n_sub, S, N, T, cdt, out_dtype):
    """Builds the kernel body for one grid step.

    Refs:
      x_ref    : (b_blk, S, N)   natural-layout input block (input dtype)
      w1_ref   : (T, T)          I_{b_per_tile} (x) (W1^T - I), compute dtype
      w2_ref   : (S, S)          conv2 weight, compute dtype
      bias_ref : (S, T)          folded conv1 bias (f32)
      o_ref    : (S, b_blk*N)    lane-dense output block
      xs_ref   : (n_sub*S, T)    VMEM scratch: lane-dense x, compute dtype
    """

    def kernel(x_ref, w1_ref, w2_ref, bias_ref, o_ref, xs_ref):
        # 1) Relayout natural (b_blk, S, N) -> lane-dense (n_sub*S, T) in VMEM.
        #    Static sub-tile lane slices; unrolled (b_blk is capped by _plan).
        for b in range(b_blk):
            j, bi = divmod(b, b_per_tile)
            xs_ref[j * S:(j + 1) * S, bi * N:(bi + 1) * N] = (
                x_ref[b].astype(cdt))

        # 2) conv1 (+ folded "-x" residual) for the whole block in ONE stacked
        #    MXU matmul: (n_sub*S, T) @ (T, T) with f32 accumulation.
        h = jnp.dot(xs_ref[...], w1_ref[...],
                    preferred_element_type=jnp.float32)

        # 3) conv2 + folded conv1-bias + relu per lane-dense sub-slab; every
        #    output store is full-width / 128-lane aligned (no masked vst).
        for j in range(n_sub):
            hj = h[j * S:(j + 1) * S, :].astype(cdt)
            out = jnp.dot(w2_ref[...], hj, preferred_element_type=jnp.float32)
            out = jnp.maximum(out + bias_ref[...], 0.0)
            o_ref[:, j * T:(j + 1) * T] = out.astype(out_dtype)

    return kernel


def _plan(B, S, N, x_itemsize, *, max_batch_per_block=64,
          slab_budget_bytes=4 << 20, target_steps=4):
    """Choose batch blocking: (b_blk, n_blocks, b_pad, b_per_tile, n_sub, T)."""
    g = math.gcd(N, 128)
    b_per_tile = 128 // g            # batch slots per lane tile
    T = b_per_tile * N               # lane-tile width (a multiple of 128)

    if B < b_per_tile:
        # Tiny batch: a single block covering everything; the output block is
        # the full (S, B*N) array, so the (8,128) tiling rule is satisfied
        # even though B*N < 128.
        # TODO(synk): a masked tail store would let tiny batches share a full
        # 128-lane tile instead of running lane-sparse.
        return dict(b_blk=B, n_blocks=1, b_pad=B,
                    b_per_tile=B, n_sub=1, T=B * N)

    b_pad_min = _round_up(B, b_per_tile)
    # Per-step batch count: multiple of b_per_tile, capped by a per-step HBM
    # slab budget and a code-size cap on the unrolled relayout loop.
    cap_budget = max(1, slab_budget_bytes // max(1, S * N * x_itemsize))
    b_blk = max(b_per_tile,
                (min(max_batch_per_block, cap_budget) // b_per_tile)
                * b_per_tile)
    b_blk = min(b_blk, b_pad_min)
    n_blocks = pl.cdiv(b_pad_min, b_blk)

    # Megacore: aim for >= target_steps grid steps (>= 2 per v7x TensorCore)
    # whenever the batch allows it, so both cores get work and the automatic
    # pipeline has iterations to overlap.
    units = b_pad_min // b_per_tile
    want = target_steps if units >= target_steps else (2 if units >= 2 else 1)
    if n_blocks < want:
        b_blk = _round_up(pl.cdiv(b_pad_min, want), b_per_tile)
        n_blocks = pl.cdiv(b_pad_min, b_blk)

    b_pad = b_blk * n_blocks
    return dict(b_blk=b_blk, n_blocks=n_blocks, b_pad=b_pad,
                b_per_tile=b_per_tile, n_sub=b_blk // b_per_tile, T=T)


def gcn_forward(x, w1, b1, w2, *, compute_dtype=jnp.bfloat16):
    """Pallas-TPU forward of GCN.

    x : (B, S, N) activations   (S = num_state, N = num_node)
    w1: (N, N) conv1 weight [out, in];  b1: (N,) conv1 bias
    w2: (S, S) conv2 weight [out, in]   (conv2 has no bias)

    Matches  relu(conv2(conv1(x.permute(0,2,1)).permute(0,2,1) - x)).

    compute_dtype is the MXU operand dtype (default bf16: halves resident
    weight VMEM, 2-4x MXU rate on v6e/v7x).  Accumulation, folded constants,
    bias-add and relu stay in f32; only the final store casts to x.dtype.
    """
    B, S, N = x.shape
    out_dtype = x.dtype
    cdt = jnp.dtype(compute_dtype)

    plan = _plan(B, S, N, x.dtype.itemsize)
    b_blk, n_blocks, b_pad = plan["b_blk"], plan["n_blocks"], plan["b_pad"]
    b_per_tile, n_sub, T = plan["b_per_tile"], plan["n_sub"], plan["T"]
    L = b_blk * N

    # ---- trace-time parameter folding (f32; free at runtime) ----------------
    w1eff = w1.T.astype(jnp.float32) - jnp.eye(N, dtype=jnp.float32)   # W1^T - I
    # Single small resident tile reused for every 128-lane sub-slab.
    # TODO(synk): for very large num_node (N >= ~4096) the resident (N, N) tile
    # gets big; that regime needs a K grid axis with an f32 accumulator.
    w1tile = jnp.kron(jnp.eye(b_per_tile, dtype=jnp.float32), w1eff).astype(cdt)
    bias_tile = (jnp.sum(w2.astype(jnp.float32), axis=1)[:, None]
                 * jnp.tile(b1.astype(jnp.float32), b_per_tile)[None, :])  # (S, T) f32
    w2c = w2.astype(cdt)

    # ---- batch padding (only when B is not a multiple of the lane unit) -----
    # TODO(synk): a masked tail block would avoid the padded-batch HBM traffic
    # for small / odd batch sizes.
    if b_pad != B:
        x = jnp.pad(x, ((0, b_pad - B), (0, 0), (0, 0)))

    # ---- VMEM budget: sum of actual (double-buffered) allocations + headroom
    lane, sub = 128, 8
    isz_x = x.dtype.itemsize
    isz_o = jnp.dtype(out_dtype).itemsize
    isz_c = cdt.itemsize
    x_blk = b_blk * _round_up(S, sub) * _round_up(N, lane) * isz_x
    o_blk = _round_up(S, sub) * _round_up(L, lane) * isz_o
    w1_b = _round_up(T, sub) * _round_up(T, lane) * isz_c
    w2_b = _round_up(S, sub) * _round_up(S, lane) * isz_c
    bias_b = _round_up(S, sub) * _round_up(T, lane) * 4
    xs_b = _round_up(n_sub * S, sub) * _round_up(T, lane) * isz_c
    est = 2 * (x_blk + o_blk + w1_b + w2_b + bias_b) + xs_b
    vmem_limit = int(min(48 << 20, max(8 << 20, est + (2 << 20))))

    kernel = _make_gcn_kernel(b_blk, b_per_tile, n_sub, S, N, T, cdt, out_dtype)

    out_t = pl.pallas_call(
        kernel,
        out_shape=jax.ShapeDtypeStruct((S, b_pad * N), out_dtype),
        grid_spec=pltpu.PrefetchScalarGridSpec(
            num_scalar_prefetch=0,
            grid=(n_blocks,),
            in_specs=[
                pl.BlockSpec((b_blk, S, N), lambda i: (i, 0, 0)),  # x (natural layout)
                pl.BlockSpec((T, T), lambda i: (0, 0)),            # W1 tile (resident)
                pl.BlockSpec((S, S), lambda i: (0, 0)),            # W2      (resident)
                pl.BlockSpec((S, T), lambda i: (0, 0)),            # bias    (resident)
            ],
            out_specs=pl.BlockSpec((S, L), lambda i: (0, i)),      # lane-dense output
            scratch_shapes=[pltpu.VMEM((n_sub * S, T), cdt)],
        ),
        compiler_params=pltpu.CompilerParams(
            dimension_semantics=("parallel",),
            vmem_limit_bytes=vmem_limit),
    )(x, w1tile, w2c, bias_tile)

    # Undo the lane-dense layout: (S, b_pad*N) -> (B, S, N).
    # TODO(synk): if the surrounding model can consume the (S, B*N) layout
    # directly, this reshape/transpose (one HBM pass over the output) disappears.
    out = jnp.transpose(out_t.reshape(S, b_pad, N)[:, :B, :], (1, 0, 2))
    return out


def gcn_reference(x, w1, b1, w2):
    # Pure-JAX f32 reference mirroring the PyTorch forward.
    h = jnp.einsum("bsm,nm->bsn", x, w1) + b1[None, None, :]
    h = h - x
    return jnp.maximum(jnp.einsum("ts,bsn->btn", w2, h), 0.0)


if __name__ == "__main__":
    num_state = 32   # S
    num_node = 16    # N

    key = jax.random.PRNGKey(0)
    kx, kw1, kb1, kw2, kx2 = jax.random.split(key, 5)

    # Conv1d(kernel_size=1) parameters as dense matrices (deterministic init).
    bound1 = 1.0 / (num_node ** 0.5)
    w1 = jax.random.uniform(kw1, (num_node, num_node), jnp.float32, -bound1, bound1)
    b1 = jax.random.uniform(kb1, (num_node,), jnp.float32, -bound1, bound1)
    bound2 = 1.0 / (num_state ** 0.5)
    w2 = jax.random.uniform(kw2, (num_state, num_state), jnp.float32, -bound2, bound2)

    def check(xin, compute_dtype, atol, rtol, tag):
        out = gcn_forward(xin, w1, b1, w2, compute_dtype=compute_dtype)
        out = jax.block_until_ready(out)
        ref = gcn_reference(xin, w1, b1, w2)
        assert out.shape == xin.shape, (tag, out.shape, xin.shape)
        assert jnp.allclose(out, ref, atol=atol, rtol=rtol), (
            f"{tag}: max abs err {jnp.max(jnp.abs(out - ref))}")

    # Small-batch path (single block), f32 compute: tight tolerance.
    x = jax.random.normal(kx, (2, num_state, num_node), dtype=jnp.float32)
    check(x, jnp.float32, 1e-4, 1e-4, "B=2 f32")
    # Default bf16 MXU operands (f32 accumulation / epilogue): bf16 tolerance.
    check(x, jnp.bfloat16, 3e-2, 3e-2, "B=2 bf16")
    # Multi-block path: batch padding, 2 grid steps, 2 lane sub-slabs per step.
    x2 = jax.random.normal(kx2, (20, num_state, num_node), dtype=jnp.float32)
    check(x2, jnp.bfloat16, 3e-2, 3e-2, "B=20 bf16")

    print("KERNEL_OK")
</pallas_src>

<mosaic_0001>
module attributes {stable_mosaic.version = 11 : i64} {
  func.func @kernel(%arg0: i32, %arg1: memref<2x32x16xf32, #tpu.memory_space<vmem>>, %arg2: memref<32x32xf32, #tpu.memory_space<vmem>>, %arg3: memref<32x32xf32, #tpu.memory_space<vmem>>, %arg4: memref<32x32xf32, #tpu.memory_space<vmem>>, %arg5: memref<32x32xf32, #tpu.memory_space<vmem>>, %arg6: memref<32x32xf32, #tpu.memory_space<vmem>>) attributes {dimension_semantics = [#tpu.dimension_semantics<parallel>], iteration_bounds = array<i64: 1>, scalar_prefetch = 0 : i64, scratch_operands = 1 : i64, tpu.core_type = #tpu.core_type<tc>, window_params = [{transform_indices = @transform_0, window_bounds = array<i64: 2, 32, 16>}, {pipeline_mode = #tpu.pipeline_mode<synchronous>, transform_indices = @transform_1, window_bounds = array<i64: 32, 32>}, {pipeline_mode = #tpu.pipeline_mode<synchronous>, transform_indices = @transform_2, window_bounds = array<i64: 32, 32>}, {pipeline_mode = #tpu.pipeline_mode<synchronous>, transform_indices = @transform_3, window_bounds = array<i64: 32, 32>}, {transform_indices = @transform_4, window_bounds = array<i64: 32, 32>}]} {
    %c0 = arith.constant 0 : index
    %c0_0 = arith.constant 0 : index
    %c0_1 = arith.constant 0 : index
    %0 = vector.load %arg1[%c0, %c0_0, %c0_1] : memref<2x32x16xf32, #tpu.memory_space<vmem>>, vector<1x32x16xf32>
    %1 = vector.shape_cast %0 : vector<1x32x16xf32> to vector<32x16xf32>
    %c0_2 = arith.constant 0 : index
    %c0_3 = arith.constant 0 : index
    %2 = vector.load %arg6[%c0_2, %c0_3] : memref<32x32xf32, #tpu.memory_space<vmem>>, vector<32x16xf32>
    tpu.vector_store %arg6[%c0_2, %c0_3], %1 {strides = array<i32>} : memref<32x32xf32, #tpu.memory_space<vmem>>, vector<32x16xf32>,
    %c1 = arith.constant 1 : index
    %c0_4 = arith.constant 0 : index
    %c0_5 = arith.constant 0 : index
    %3 = vector.load %arg1[%c1, %c0_4, %c0_5] : memref<2x32x16xf32, #tpu.memory_space<vmem>>, vector<1x32x16xf32>
    %4 = vector.shape_cast %3 : vector<1x32x16xf32> to vector<32x16xf32>
    %c0_6 = arith.constant 0 : index
    %c16 = arith.constant 16 : index
    %5 = vector.load %arg6[%c0_6, %c16] : memref<32x32xf32, #tpu.memory_space<vmem>>, vector<32x16xf32>
    tpu.vector_store %arg6[%c0_6, %c16], %4 {strides = array<i32>} : memref<32x32xf32, #tpu.memory_space<vmem>>, vector<32x16xf32>,
    %c0_7 = arith.constant 0 : index
    %c0_8 = arith.constant 0 : index
    %6 = vector.load %arg6[%c0_7, %c0_8] : memref<32x32xf32, #tpu.memory_space<vmem>>, vector<32x32xf32>
    %c0_9 = arith.constant 0 : index
    %c0_10 = arith.constant 0 : index
    %7 = vector.load %arg2[%c0_9, %c0_10] : memref<32x32xf32, #tpu.memory_space<vmem>>, vector<32x32xf32>
    %cst = arith.constant dense<0.000000e+00> : vector<32x32xf32>
    %8 = tpu.matmul %6, %7, %cst {dimension_numbers = #tpu.dot_dimension_numbers<[1], [0], [0], [1], [0, 0, 1, 1], [], []>} : vector<32x32xf32>, vector<32x32xf32>, vector<32x32xf32> -> vector<32x32xf32>
    %c0_11 = arith.constant 0 : index
    %c0_12 = arith.constant 0 : index
    %9 = vector.load %arg3[%c0_11, %c0_12] : memref<32x32xf32, #tpu.memory_space<vmem>>, vector<32x32xf32>
    %cst_13 = arith.constant dense<0.000000e+00> : vector<32x32xf32>
    %10 = tpu.matmul %9, %8, %cst_13 {dimension_numbers = #tpu.dot_dimension_numbers<[1], [0], [0], [1], [0, 0, 1, 1], [], []>} : vector<32x32xf32>, vector<32x32xf32>, vector<32x32xf32> -> vector<32x32xf32>
    %c0_14 = arith.constant 0 : index
    %c0_15 = arith.constant 0 : index
    %11 = vector.load %arg4[%c0_14, %c0_15] : memref<32x32xf32, #tpu.memory_space<vmem>>, vector<32x32xf32>
    %12 = arith.addf %10, %11 : vector<32x32xf32>
    %cst_16 = arith.constant 0.000000e+00 : f32
    %13 = vector.broadcast %cst_16 : f32 to vector<32x32xf32>
    %14 = arith.maximumf %12, %13 : vector<32x32xf32>
    %c0_17 = arith.constant 0 : index
    %c0_18 = arith.constant 0 : index
    %15 = vector.load %arg5[%c0_17, %c0_18] : memref<32x32xf32, #tpu.memory_space<vmem>>, vector<32x32xf32>
    tpu.vector_store %arg5[%c0_17, %c0_18], %14 {strides = array<i32>} : memref<32x32xf32, #tpu.memory_space<vmem>>, vector<32x32xf32>,
    return
  }
  func.func @transform_0(%arg0: i32) -> (i32, i32, i32) {
    %c0_i32 = arith.constant 0 : i32
    %c0_i32_0 = arith.constant 0 : i32
    %c0_i32_1 = arith.constant 0 : i32
    return %arg0, %c0_i32, %c0_i32_0 : i32, i32, i32
  }
  func.func @transform_1(%arg0: i32) -> (i32, i32) {
    %c0_i32 = arith.constant 0 : i32
    %c0_i32_0 = arith.constant 0 : i32
    %c0_i32_1 = arith.constant 0 : i32
    return %c0_i32, %c0_i32_0 : i32, i32
  }
  func.func @transform_2(%arg0: i32) -> (i32, i32) {
    %c0_i32 = arith.constant 0 : i32
    %c0_i32_0 = arith.constant 0 : i32
    %c0_i32_1 = arith.constant 0 : i32
    return %c0_i32, %c0_i32_0 : i32, i32
  }
  func.func @transform_3(%arg0: i32) -> (i32, i32) {
    %c0_i32 = arith.constant 0 : i32
    %c0_i32_0 = arith.constant 0 : i32
    %c0_i32_1 = arith.constant 0 : i32
    return %c0_i32, %c0_i32_0 : i32, i32
  }
  func.func @transform_4(%arg0: i32) -> (i32, i32) {
    %c0_i32 = arith.constant 0 : i32
    %c0_i32_0 = arith.constant 0 : i32
    return %c0_i32, %arg0 : i32, i32
  }
}

</mosaic_0001>

<llo_original>
// kernel: tpu_custom_call.1
$region0: #{tpu_custom_call.1}
  #allocation0 [shape = 'u32[]', space=smem, size = 0x4, offset = 0x4, fixed_abs, tag = 'smem constant byte address 0x4 - core index']
  #allocation1 [shape = 'u32[72,128]{1,0:T(1,128)}', space=vmem, size = 0x9000, scoped, tag = 'internal scratch']
  #allocation2 [shape = 'f32[32,32]{1,0:T(8,128)}', space=vmem, size = 0x4000, scoped, tag = 'scratch operand']
  %s0 = inlined_call_operand.vmem [shape: f32[2,32,16], index: 0, kind: input, shape index: {}]
  %s1 = inlined_call_operand.vmem [shape: f32[32,32], index: 1, kind: input, shape index: {}]
  %s2 = inlined_call_operand.vmem [shape: f32[32,32], index: 2, kind: input, shape index: {}]
  %s3 = inlined_call_operand.vmem [shape: f32[32,32], index: 3, kind: input, shape index: {}]
  %s4 = inlined_call_operand.hbm [shape: f32[32,32], index: 4, kind: output, shape index: {}]
  %s5 = sld [smem:[#allocation0]]
  $region26: #{tpu_custom_call.1} parent=0
    _
  %s7 = ssub.s32 1, %s5
  %s8 = scalar_select 0, %s7, %s5
  $region1: #{tpu_custom_call.1} parent=0
    #allocation3 [shape = 'u8[16384]{0}', space=vmem, size = 0x4000, scoped, tag = 'output window, operand 0, single buffered']
    #allocation4 [shape = 's32[1]{0}', space=sflag, size = 0x4, scoped, tag = 'scoped memory for tpu_custom_call.1']
    %9 = vsyncpa [#allocation4], 0
    // Predicated region
    $region2: #{tpu_custom_call.1} parent=1 // pred_check
      _
    $region3: #{tpu_custom_call.1} parent=1 // pred_check_branch
      %11 = sbr.rel (0) target = $region5
    $region4: #{tpu_custom_call.1} parent=1 // pred_region
      _
    $region5: #{tpu_custom_call.1} parent=1 // pred_fallthru
      _
    // Predicated region
    $region6: #{tpu_custom_call.1} parent=1 // pred_check
      _
    $region7: #{tpu_custom_call.1} parent=1 // pred_check_branch
      %13 = sbr.rel (0) target = $region9
    $region8: #{tpu_custom_call.1} parent=1 // pred_region
      _
    $region9: #{tpu_custom_call.1} parent=1 // pred_fallthru
      _
    // Predicated region
    $region10: #{tpu_custom_call.1} parent=1 // pred_check
      _
    $region11: #{tpu_custom_call.1} parent=1 // pred_check_branch
      %15 = sbr.rel (0) target = $region13
    $region12: #{tpu_custom_call.1} parent=1 // pred_region
      _
    $region13: #{tpu_custom_call.1} parent=1 // pred_fallthru
      _
    // Predicated region
    $region14: #{tpu_custom_call.1} parent=1 // pred_check
      _
    $region15: #{tpu_custom_call.1} parent=1 // pred_check_branch
      %17 = sbr.rel (0) target = $region17
    $region16: #{tpu_custom_call.1} parent=1 // pred_region
      _
    $region17: #{tpu_custom_call.1} parent=1 // pred_fallthru
      _
    %v18 = vld [vmem:[%s0] sm:$0xff]
    %v19 = vld [vmem:[%s0 + $0x8] sm:$0xff]
    %v20 = vld [vmem:[%s0 + $0x10] sm:$0xff]
    %v21 = vld [vmem:[%s0 + $0x18] sm:$0xff]
    %vm22 = vcmask 130048
    %23 = vst.msk [vmem:[#allocation2] sm:$0xff] %vm22, %v18
    %24 = vst.msk [vmem:[#allocation2 + $0x8] sm:$0xff] %vm22, %v19
    %25 = vst.msk [vmem:[#allocation2 + $0x10] sm:$0xff] %vm22, %v20
    %26 = vst.msk [vmem:[#allocation2 + $0x18] sm:$0xff] %vm22, %v21
    %s27 = scalar_lea.vmem %s0, 32
    %v28 = vld [vmem:[%s27] sm:$0xff]
    %v29 = vld [vmem:[%s27 + $0x8] sm:$0xff]
    %v30 = vld [vmem:[%s27 + $0x10] sm:$0xff]
    %v31 = vld [vmem:[%s27 + $0x18] sm:$0xff]
    %36 = vrot.lane.b32.xlu0 %v28, 16
    %v37 = vpop.permute.xlu0 %36
    %38 = vrot.lane.b32.xlu0 %v29, 16
    %v39 = vpop.permute.xlu0 %38
    %40 = vrot.lane.b32.xlu0 %v30, 16
    %v41 = vpop.permute.xlu0 %40
    %42 = vrot.lane.b32.xlu0 %v31, 16
    %v43 = vpop.permute.xlu0 %42
    %vm48 = vcmask 261248
    %49 = vst.msk [vmem:[#allocation2] sm:$0xff] %vm48, %v37
    %50 = vst.msk [vmem:[#allocation2 + $0x8] sm:$0xff] %vm48, %v39
    %51 = vst.msk [vmem:[#allocation2 + $0x10] sm:$0xff] %vm48, %v41
    %52 = vst.msk [vmem:[#allocation2 + $0x18] sm:$0xff] %vm48, %v43
    %v53 = vld [vmem:[#allocation2] sm:$0xff]
    %v54 = vld [vmem:[#allocation2 + $0x8] sm:$0xff]
    %v55 = vld [vmem:[#allocation2 + $0x10] sm:$0xff]
    %v56 = vld [vmem:[#allocation2 + $0x18] sm:$0xff]
    %v57 = vld [vmem:[%s1] sm:$0xff]
    %v58 = vld [vmem:[%s1 + $0x8] sm:$0xff]
    %v59 = vld [vmem:[%s1 + $0x10] sm:$0xff]
    %v60 = vld [vmem:[%s1 + $0x18] sm:$0xff]
    %vm61 = vcmask 261120
    %v63 = vsel %vm61, %v53, 0
    %v66 = vsel %vm61, %v54, 0
    %v69 = vsel %vm61, %v55, 0
    %v72 = vsel %vm61, %v56, 0
    %74 = vmatpush.msra.mxu0 0.0
    %75 = vmatpush.msra.mxu0 0.0
    %76 = vmatpush.msra.mxu0 0.0
    %77 = vmatpush.msra.mxu0 0.0
    %78 = vmatpush.msra.mxu0 0.0
    %79 = vmatpush.msra.mxu0 0.0
    %80 = vmatpush.msra.mxu0 0.0
    %81 = vmatpush.msra.mxu0 0.0
    %82 = vmatpush.msra.mxu0 0.0
    %83 = vmatpush.msra.mxu0 0.0
    %84 = vmatpush.msra.mxu0 0.0
    %85 = vmatpush.msra.mxu0 0.0
    %86 = vmatpush.msra.mxu0 %v60
    %87 = vmatpush.msra.mxu0 %v59
    %88 = vmatpush.msra.mxu0 %v58
    %89 = vmatpush.msra.mxu0 %v57
    %90 = vmatmul.f32.gmra.mxu0 %v63
    %v91 = vpop.f32.mrf.mxu0
    %v92 = vadd.f32 0.0, %v91
    %93 = vmatmul.f32.gmra.mxu0 %v66
    %v94 = vpop.f32.mrf.mxu0
    %v95 = vadd.f32 0.0, %v94
    %96 = vmatmul.f32.gmra.mxu0 %v69
    %v97 = vpop.f32.mrf.mxu0
    %v98 = vadd.f32 0.0, %v97
    %99 = vmatmul.f32.gmra.mxu0 %v72
    %v100 = vpop.f32.mrf.mxu0
    %v101 = vadd.f32 0.0, %v100
    %102 = vdwg.mxu0
    %v103 = vld [vmem:[%s2] sm:$0xff]
    %v104 = vld [vmem:[%s2 + $0x8] sm:$0xff]
    %v105 = vld [vmem:[%s2 + $0x10] sm:$0xff]
    %v106 = vld [vmem:[%s2 + $0x18] sm:$0xff]
    %v107 = vld [vmem:[%s3] sm:$0xff]
    %v108 = vld [vmem:[%s3 + $0x8] sm:$0xff]
    %v109 = vld [vmem:[%s3 + $0x10] sm:$0xff]
    %v110 = vld [vmem:[%s3 + $0x18] sm:$0xff]
    %v112 = vsel %vm61, %v103, 0
    %v115 = vsel %vm61, %v104, 0
    %v118 = vsel %vm61, %v105, 0
    %v121 = vsel %vm61, %v106, 0
    %123 = vmatpush.msra.mxu0 0.0
    %124 = vmatpush.msra.mxu0 0.0
    %125 = vmatpush.msra.mxu0 0.0
    %126 = vmatpush.msra.mxu0 0.0
    %127 = vmatpush.msra.mxu0 0.0
    %128 = vmatpush.msra.mxu0 0.0
    %129 = vmatpush.msra.mxu0 0.0
    %130 = vmatpush.msra.mxu0 0.0
    %131 = vmatpush.msra.mxu0 0.0
    %132 = vmatpush.msra.mxu0 0.0
    %133 = vmatpush.msra.mxu0 0.0
    %134 = vmatpush.msra.mxu0 0.0
    %135 = vmatpush.msra.mxu0 %v101
    %136 = vmatpush.msra.mxu0 %v98
    %137 = vmatpush.msra.mxu0 %v95
    %138 = vmatpush.msra.mxu0 %v92
    %139 = vmatmul.f32.gmra.mxu0 %v112
    %v140 = vpop.f32.mrf.mxu0
    %v141 = vadd.f32 %v107, %v140
    %142 = vmatmul.f32.gmra.mxu0 %v115
    %v143 = vpop.f32.mrf.mxu0
    %v144 = vadd.f32 %v108, %v143
    %145 = vmatmul.f32.gmra.mxu0 %v118
    %v146 = vpop.f32.mrf.mxu0
    %v147 = vadd.f32 %v109, %v146
    %148 = vmatmul.f32.gmra.mxu0 %v121
    %v149 = vpop.f32.mrf.mxu0
    %v150 = vadd.f32 %v110, %v149
    %151 = vdwg.mxu0
    %v152 = vmax.f32 %v141, 0.0
    %v153 = vmax.f32 %v144, 0.0
    %v154 = vmax.f32 %v147, 0.0
    %v155 = vmax.f32 %v150, 0.0
    %156 = vst.msk [vmem:[#allocation3] sm:$0xff] %vm61, %v152
    %157 = vst.msk [vmem:[#allocation3 + $0x8] sm:$0xff] %vm61, %v153
    %158 = vst.msk [vmem:[#allocation3 + $0x10] sm:$0xff] %vm61, %v154
    %159 = vst.msk [vmem:[#allocation3 + $0x18] sm:$0xff] %vm61, %v155
    // Predicated region
    $region18: #{tpu_custom_call.1} parent=1 // pred_check
      _
    $region19: #{tpu_custom_call.1} parent=1 // pred_check_branch
      %161 = sbr.rel (0) target = $region21
    $region20: #{tpu_custom_call.1} parent=1 // pred_region
      %163 = vsyncadd [#allocation4], 0
      %s164 = sshll.u32 [#allocation3], 4
      %s165 = int_to_ptr.vmem [resolvable:$true] %s164
      %s166 = sshll.u32 %s4, 4
      %s167 = int_to_ptr.hbm [resolvable:$true] %s166
      %172 = dma.vmem_to_hbm [thread:$0]  %s165, 512, %s167, [#allocation4], 128, 128, 8
    $region21: #{tpu_custom_call.1} parent=1 // pred_fallthru
      _
    // Predicated region
    $region22: #{tpu_custom_call.1} parent=1 // pred_check
      _
    $region23: #{tpu_custom_call.1} parent=1 // pred_check_branch
      %174 = sbr.rel (0) target = $region25
    $region24: #{tpu_custom_call.1} parent=1 // pred_region
      %176 = dma.done [#allocation4], 512
    $region25: #{tpu_custom_call.1} parent=1 // pred_fallthru
      _
    %177 = vsyncpa [#allocation4], 1

</llo_original>
